<compile_context>
chip_gen: v5e
topology: v5e:2x2
jax: 0.10.0
libtpu: 0.0.40
codegen_flags: <defaults>
</compile_context>

<pallas_src>
import functools

import jax
import jax.numpy as jnp
import numpy as np
from jax import lax
from jax.experimental import pallas as pl
from jax.experimental.pallas import tpu as pltpu


# ----------------------------- Pallas kernel ---------------------------------
def _double_conv_kernel(x_ref, w1_ref, t1_ref, w2_ref, t2_ref, mask_ref,
                        o_ref, mid_ref, *, H, W, Qp, OFF):
    """Fused DoubleConv (3x3 conv + folded BN + ReLU) x 2 for one batch element.

    x_ref:    (1, Cin, Lin)    zero-padded input, spatial flattened (Hp*Wp + tail zeros)
    w1_ref:   (Cmid, 9*Cin)    bf16 conv1 weights (BN scale folded), col=(ky*3+kx)*Cin+ci
    t1_ref:   (Cmid, 1)        f32 conv1 folded BN shift
    w2_ref:   (Cout, 9*Cmid)   bf16 conv2 weights (BN scale folded)
    t2_ref:   (Cout, 1)        f32 conv2 folded BN shift
    mask_ref: (1, Qp)          1.0 where (j % Wp) < W and j < H*Wp, else 0.0
    o_ref:    (1, Cout, Qp)    columns where mask==0 are don't-care (sliced in wrapper)
    mid_ref:  (Cmid, Lmid)     VMEM scratch: masked mid activation written at column OFF
    """
    Wp = W + 2
    Cmid = w1_ref.shape[0]

    x = x_ref[0]                                               # (Cin, Lin) f32

    # ---- conv1: flat-shift im2col, one bf16 MXU matmul, f32 accumulate ----
    taps = [x[:, dy * Wp + dx: dy * Wp + dx + Qp]
            for dy in range(3) for dx in range(3)]             # 9 x (Cin, Qp)
    patches = jnp.concatenate(taps, axis=0).astype(jnp.bfloat16)   # (9*Cin, Qp)
    y1 = jnp.dot(w1_ref[...], patches,
                 preferred_element_type=jnp.float32)           # (Cmid, Qp) f32
    # f32 epilogue; mask zeros row-wrap/tail columns so they become conv2's halo zeros.
    y1 = jnp.maximum(y1 + t1_ref[...], 0.0) * mask_ref[...]

    # ---- mid activation in VMEM at a lane-aligned offset ----
    # Only the front halo slab [0, OFF) is ever read un-written by valid outputs;
    # zero just that (tiny) instead of memsetting the whole scratch each step.
    mid_ref[:, pl.ds(0, OFF)] = jnp.zeros((Cmid, OFF), dtype=mid_ref.dtype)
    mid_ref[:, pl.ds(OFF, Qp)] = y1                            # aligned, unmasked stores

    # ---- conv2: taps are static lane-offset windows around OFF ----
    taps2 = [mid_ref[:, pl.ds(OFF + (dy - 1) * Wp + (dx - 1), Qp)]
             for dy in range(3) for dx in range(3)]            # 9 x (Cmid, Qp)
    patches2 = jnp.concatenate(taps2, axis=0).astype(jnp.bfloat16)  # (9*Cmid, Qp)
    y2 = jnp.dot(w2_ref[...], patches2,
                 preferred_element_type=jnp.float32)           # (Cout, Qp) f32
    o_ref[...] = jnp.maximum(y2 + t2_ref[...], 0.0)[None].astype(o_ref.dtype)


# ------------------------------- wrappers -------------------------------------
def fold_bn(gamma, beta, mean, var, eps=1e-5):
    scale = gamma / jnp.sqrt(var + eps)
    shift = beta - mean * scale
    return scale, shift


def _fold_weight(w_hwio, scale):
    """(3,3,Cin,Cout) HWIO + per-Cout scale -> bf16 (Cout, 9*Cin), col=(ky*3+kx)*Cin+ci."""
    w = w_hwio * scale[None, None, None, :]
    return jnp.transpose(w, (3, 0, 1, 2)).reshape(w.shape[3], -1).astype(jnp.bfloat16)


def double_conv_fused(x_nchw, params, eps=1e-5):
    """Fused DoubleConv on an NCHW input; returns NCHW output. Call under jit."""
    N, Cin, H, W = x_nchw.shape
    Cmid = params["w1"].shape[-1]
    Cout = params["w2"].shape[-1]
    Hp, Wp = H + 2, W + 2
    Q = H * Wp
    # Lane-dense compute/store width and derived buffer sizes (trace-time constants).
    Qp = int(np.ceil(Q / 128.0) * 128)
    Lin = int(np.ceil((Qp + 2 * Wp + 2) / 128.0) * 128)        # taps reach Qp + 2*Wp + 2
    OFF = int(np.ceil((Wp + 1) / 128.0) * 128)                 # lane-aligned mid offset
    Lmid = int(np.ceil((OFF + Qp + Wp + 1) / 128.0) * 128)

    s1, t1 = fold_bn(params["g1"], params["b1"], params["m1"], params["v1"], eps)
    s2, t2 = fold_bn(params["g2"], params["b2"], params["m2"], params["v2"], eps)
    w1 = _fold_weight(params["w1"], s1)                        # bf16 (Cmid, 9*Cin)
    w2 = _fold_weight(params["w2"], s2)                        # bf16 (Cout, 9*Cmid)

    # conv "same" halo + flatten + tail zeros; fused into the jitted pre-chain.
    # TODO(synk): at real UNet sizes, move this pad/concat into the kernel scratch.
    xp = jnp.pad(x_nchw, ((0, 0), (0, 0), (1, 1), (1, 1)))     # (N, Cin, Hp, Wp)
    x_flat = jnp.pad(xp.reshape(N, Cin, Hp * Wp),
                     ((0, 0), (0, 0), (0, Lin - Hp * Wp)))     # (N, Cin, Lin)

    # Trace-time constant mask (kept as an input: avoids relying on vector int-mod
    # lowering in-kernel; 1.5 KiB DMA is noise).
    cols = np.arange(Qp)
    mask = jnp.asarray((((cols % Wp) < W) & (cols < Q))
                       .astype(np.float32).reshape(1, Qp))

    kernel = functools.partial(_double_conv_kernel, H=H, W=W, Qp=Qp, OFF=OFF)
    out = pl.pallas_call(
        kernel,
        out_shape=jax.ShapeDtypeStruct((N, Cout, Qp), jnp.float32),
        grid=(N,),
        in_specs=[
            pl.BlockSpec((1, Cin, Lin), lambda n: (n, 0, 0)),
            pl.BlockSpec((Cmid, 9 * Cin), lambda n: (0, 0)),
            pl.BlockSpec((Cmid, 1), lambda n: (0, 0)),
            pl.BlockSpec((Cout, 9 * Cmid), lambda n: (0, 0)),
            pl.BlockSpec((Cout, 1), lambda n: (0, 0)),
            pl.BlockSpec((1, Qp), lambda n: (0, 0)),
        ],
        out_specs=pl.BlockSpec((1, Cout, Qp), lambda n: (n, 0, 0)),
        scratch_shapes=[pltpu.VMEM((Cmid, Lmid), jnp.float32)],
        compiler_params=pltpu.CompilerParams(dimension_semantics=("parallel",)),
    )(x_flat, w1, t1.reshape(Cmid, 1), w2, t2.reshape(Cout, 1), mask)

    # drop the lane tail and the per-row wrap columns; fused slices under jit.
    return out[:, :, :Q].reshape(N, Cout, H, Wp)[:, :, :, :W]


def bilinear_upsample_2x_align_corners(x_nchw):
    """Matches torch.nn.Upsample(scale_factor=2, mode='bilinear', align_corners=True)."""
    N, C, H, W = x_nchw.shape
    Ho, Wo = 2 * H, 2 * W

    def coords(n_in, n_out):
        s = jnp.arange(n_out, dtype=jnp.float32) * (n_in - 1) / (n_out - 1)
        i0 = jnp.clip(jnp.floor(s).astype(jnp.int32), 0, n_in - 1)
        i1 = jnp.clip(i0 + 1, 0, n_in - 1)
        return s - i0.astype(jnp.float32), i0, i1

    fy, y0, y1 = coords(H, Ho)
    fx, x0, x1 = coords(W, Wo)

    rows = (x_nchw[:, :, y0, :] * (1.0 - fy)[None, None, :, None]
            + x_nchw[:, :, y1, :] * fy[None, None, :, None])        # (N, C, Ho, W)
    out = (rows[:, :, :, x0] * (1.0 - fx)[None, None, None, :]
           + rows[:, :, :, x1] * fx[None, None, None, :])           # (N, C, Ho, Wo)
    return out


def make_up_params(in_channels, out_channels, key):
    """Deterministic synthetic parameters for Up(in_channels, out_channels, bilinear=True)."""
    mid = in_channels // 2
    ks = jax.random.split(key, 10)
    return dict(
        w1=jax.random.normal(ks[0], (3, 3, in_channels, mid), jnp.float32) * 0.1,
        g1=1.0 + 0.1 * jax.random.normal(ks[1], (mid,), jnp.float32),
        b1=0.1 * jax.random.normal(ks[2], (mid,), jnp.float32),
        m1=0.1 * jax.random.normal(ks[3], (mid,), jnp.float32),
        v1=1.0 + 0.1 * jnp.abs(jax.random.normal(ks[4], (mid,), jnp.float32)),
        w2=jax.random.normal(ks[5], (3, 3, mid, out_channels), jnp.float32) * 0.1,
        g2=1.0 + 0.1 * jax.random.normal(ks[6], (out_channels,), jnp.float32),
        b2=0.1 * jax.random.normal(ks[7], (out_channels,), jnp.float32),
        m2=0.1 * jax.random.normal(ks[8], (out_channels,), jnp.float32),
        v2=1.0 + 0.1 * jnp.abs(jax.random.normal(ks[9], (out_channels,), jnp.float32)),
    )


@jax.jit
def up_forward(params, x1, x2):
    """Equivalent of Up.forward(x1, x2) with bilinear=True. NCHW in/out. Fully jitted."""
    x1 = bilinear_upsample_2x_align_corners(x1)
    diffY = x2.shape[2] - x1.shape[2]
    diffX = x2.shape[3] - x1.shape[3]
    x1 = jnp.pad(x1, ((0, 0), (0, 0),
                      (diffY // 2, diffY - diffY // 2),
                      (diffX // 2, diffX - diffX // 2)))
    x = jnp.concatenate([x2, x1], axis=1)                           # channels = [x2, x1]
    return double_conv_fused(x, params)


# ---------------------------- reference (pure JAX) -----------------------------
def _ref_conv_bn_relu(x_nchw, w_hwio, scale, shift):
    y = lax.conv_general_dilated(
        x_nchw, w_hwio, window_strides=(1, 1), padding="SAME",
        dimension_numbers=("NCHW", "HWIO", "NCHW"),
        precision=lax.Precision.HIGHEST)
    return jnp.maximum(y * scale[None, :, None, None] + shift[None, :, None, None], 0.0)


def up_forward_ref(params, x1, x2):
    x1 = bilinear_upsample_2x_align_corners(x1)
    diffY = x2.shape[2] - x1.shape[2]
    diffX = x2.shape[3] - x1.shape[3]
    x1 = jnp.pad(x1, ((0, 0), (0, 0),
                      (diffY // 2, diffY - diffY // 2),
                      (diffX // 2, diffX - diffX // 2)))
    x = jnp.concatenate([x2, x1], axis=1)
    s1, t1 = fold_bn(params["g1"], params["b1"], params["m1"], params["v1"])
    x = _ref_conv_bn_relu(x, params["w1"], s1, t1)
    s2, t2 = fold_bn(params["g2"], params["b2"], params["m2"], params["v2"])
    x = _ref_conv_bn_relu(x, params["w2"], s2, t2)
    return x


# ----------------------------------- main --------------------------------------
if __name__ == "__main__":
    # Up(in_channels=8, out_channels=8, bilinear=True)
    # x1: low-res feature (N, in_ch//2, H, W); x2: skip (N, in_ch//2, 2H, 2W)
    in_channels, out_channels = 8, 8
    N, H, W = 2, 8, 8

    key = jax.random.PRNGKey(0)
    k_x1, k_x2, k_p = jax.random.split(key, 3)
    x1 = jax.random.normal(k_x1, (N, in_channels // 2, H, W), jnp.float32)
    x2 = jax.random.normal(k_x2, (N, in_channels // 2, 2 * H, 2 * W), jnp.float32)
    params = make_up_params(in_channels, out_channels, k_p)

    out = jax.block_until_ready(up_forward(params, x1, x2))
    ref = jax.block_until_ready(up_forward_ref(params, x1, x2))

    # NOTE: kernel matmuls use bf16 operands with f32 accumulation; reference uses
    # f32 HIGHEST (difference is well inside the tolerance at these magnitudes).
    np.testing.assert_allclose(np.asarray(out), np.asarray(ref), rtol=5e-2, atol=5e-2)
    assert out.shape == (N, out_channels, 2 * H, 2 * W)

    print("KERNEL_OK")
</pallas_src>

<mosaic_0001>
module attributes {stable_mosaic.version = 11 : i64} {
  func.func @_double_conv_kernel(%arg0: i32, %arg1: memref<1x8x512xf32, #tpu.memory_space<vmem>>, %arg2: memref<4x72xbf16, #tpu.memory_space<vmem>>, %arg3: memref<4x1xf32, #tpu.memory_space<vmem>>, %arg4: memref<8x36xbf16, #tpu.memory_space<vmem>>, %arg5: memref<8x1xf32, #tpu.memory_space<vmem>>, %arg6: memref<1x384xf32, #tpu.memory_space<vmem>>, %arg7: memref<1x8x384xf32, #tpu.memory_space<vmem>>, %arg8: memref<4x640xf32, #tpu.memory_space<vmem>>) attributes {dimension_semantics = [#tpu.dimension_semantics<parallel>], iteration_bounds = array<i64: 2>, scalar_prefetch = 0 : i64, scratch_operands = 1 : i64, tpu.core_type = #tpu.core_type<tc>, window_params = [{transform_indices = @transform_0, window_bounds = array<i64: 1, 8, 512>}, {pipeline_mode = #tpu.pipeline_mode<synchronous>, transform_indices = @transform_1, window_bounds = array<i64: 4, 72>}, {pipeline_mode = #tpu.pipeline_mode<synchronous>, transform_indices = @transform_2, window_bounds = array<i64: 4, 1>}, {pipeline_mode = #tpu.pipeline_mode<synchronous>, transform_indices = @transform_3, window_bounds = array<i64: 8, 36>}, {pipeline_mode = #tpu.pipeline_mode<synchronous>, transform_indices = @transform_4, window_bounds = array<i64: 8, 1>}, {pipeline_mode = #tpu.pipeline_mode<synchronous>, transform_indices = @transform_5, window_bounds = array<i64: 1, 384>}, {transform_indices = @transform_6, window_bounds = array<i64: 1, 8, 384>}]} {
    %c0 = arith.constant 0 : index
    %c0_0 = arith.constant 0 : index
    %c0_1 = arith.constant 0 : index
    %0 = vector.load %arg1[%c0, %c0_0, %c0_1] : memref<1x8x512xf32, #tpu.memory_space<vmem>>, vector<1x8x512xf32>
    %1 = vector.shape_cast %0 : vector<1x8x512xf32> to vector<8x512xf32>
    %2 = vector.extract_strided_slice %1 {offsets = [0, 0], sizes = [8, 384], strides = [1, 1]} : vector<8x512xf32> to vector<8x384xf32>
    %3 = vector.extract_strided_slice %1 {offsets = [0, 1], sizes = [8, 384], strides = [1, 1]} : vector<8x512xf32> to vector<8x384xf32>
    %4 = vector.extract_strided_slice %1 {offsets = [0, 2], sizes = [8, 384], strides = [1, 1]} : vector<8x512xf32> to vector<8x384xf32>
    %5 = vector.extract_strided_slice %1 {offsets = [0, 18], sizes = [8, 384], strides = [1, 1]} : vector<8x512xf32> to vector<8x384xf32>
    %6 = vector.extract_strided_slice %1 {offsets = [0, 19], sizes = [8, 384], strides = [1, 1]} : vector<8x512xf32> to vector<8x384xf32>
    %7 = vector.extract_strided_slice %1 {offsets = [0, 20], sizes = [8, 384], strides = [1, 1]} : vector<8x512xf32> to vector<8x384xf32>
    %8 = vector.extract_strided_slice %1 {offsets = [0, 36], sizes = [8, 384], strides = [1, 1]} : vector<8x512xf32> to vector<8x384xf32>
    %9 = vector.extract_strided_slice %1 {offsets = [0, 37], sizes = [8, 384], strides = [1, 1]} : vector<8x512xf32> to vector<8x384xf32>
    %10 = vector.extract_strided_slice %1 {offsets = [0, 38], sizes = [8, 384], strides = [1, 1]} : vector<8x512xf32> to vector<8x384xf32>
    %11 = tpu.concatenate %2, %3, %4, %5, %6, %7, %8, %9, %10 in 0 : vector<8x384xf32>, vector<8x384xf32>, vector<8x384xf32>, vector<8x384xf32>, vector<8x384xf32>, vector<8x384xf32>, vector<8x384xf32>, vector<8x384xf32>, vector<8x384xf32> -> vector<72x384xf32>
    %12 = arith.truncf %11 : vector<72x384xf32> to vector<72x384xbf16>
    %c0_2 = arith.constant 0 : index
    %c0_3 = arith.constant 0 : index
    %13 = vector.load %arg2[%c0_2, %c0_3] : memref<4x72xbf16, #tpu.memory_space<vmem>>, vector<4x72xbf16>
    %cst = arith.constant dense<0.000000e+00> : vector<4x384xf32>
    %14 = tpu.matmul %13, %12, %cst {dimension_numbers = #tpu.dot_dimension_numbers<[1], [0], [0], [1], [0, 0, 1, 1], [], []>} : vector<4x72xbf16>, vector<72x384xbf16>, vector<4x384xf32> -> vector<4x384xf32>
    %c0_4 = arith.constant 0 : index
    %c0_5 = arith.constant 0 : index
    %15 = vector.load %arg3[%c0_4, %c0_5] : memref<4x1xf32, #tpu.memory_space<vmem>>, vector<4x1xf32>
    %16 = vector.broadcast %15 : vector<4x1xf32> to vector<4x384xf32>
    %17 = arith.addf %14, %16 : vector<4x384xf32>
    %cst_6 = arith.constant 0.000000e+00 : f32
    %18 = vector.broadcast %cst_6 : f32 to vector<4x384xf32>
    %19 = arith.maximumf %17, %18 : vector<4x384xf32>
    %c0_7 = arith.constant 0 : index
    %c0_8 = arith.constant 0 : index
    %20 = vector.load %arg6[%c0_7, %c0_8] : memref<1x384xf32, #tpu.memory_space<vmem>>, vector<1x384xf32>
    %21 = vector.broadcast %20 : vector<1x384xf32> to vector<4x384xf32>
    %22 = arith.mulf %19, %21 : vector<4x384xf32>
    %cst_9 = arith.constant 0.000000e+00 : f32
    %23 = vector.broadcast %cst_9 : f32 to vector<4x128xf32>
    %c0_10 = arith.constant 0 : index
    %c0_11 = arith.constant 0 : index
    %24 = vector.load %arg8[%c0_10, %c0_11] : memref<4x640xf32, #tpu.memory_space<vmem>>, vector<4x128xf32>
    tpu.vector_store %arg8[%c0_10, %c0_11], %23 {strides = array<i32>} : memref<4x640xf32, #tpu.memory_space<vmem>>, vector<4x128xf32>,
    %c0_12 = arith.constant 0 : index
    %c128 = arith.constant 128 : index
    %25 = vector.load %arg8[%c0_12, %c128] : memref<4x640xf32, #tpu.memory_space<vmem>>, vector<4x384xf32>
    tpu.vector_store %arg8[%c0_12, %c128], %22 {strides = array<i32>} : memref<4x640xf32, #tpu.memory_space<vmem>>, vector<4x384xf32>,
    %c0_13 = arith.constant 0 : index
    %c109 = arith.constant 109 : index
    %26 = vector.load %arg8[%c0_13, %c109] : memref<4x640xf32, #tpu.memory_space<vmem>>, vector<4x384xf32>
    %c0_14 = arith.constant 0 : index
    %c110 = arith.constant 110 : index
    %27 = vector.load %arg8[%c0_14, %c110] : memref<4x640xf32, #tpu.memory_space<vmem>>, vector<4x384xf32>
    %c0_15 = arith.constant 0 : index
    %c111 = arith.constant 111 : index
    %28 = vector.load %arg8[%c0_15, %c111] : memref<4x640xf32, #tpu.memory_space<vmem>>, vector<4x384xf32>
    %c0_16 = arith.constant 0 : index
    %c127 = arith.constant 127 : index
    %29 = vector.load %arg8[%c0_16, %c127] : memref<4x640xf32, #tpu.memory_space<vmem>>, vector<4x384xf32>
    %c0_17 = arith.constant 0 : index
    %c128_18 = arith.constant 128 : index
    %30 = vector.load %arg8[%c0_17, %c128_18] : memref<4x640xf32, #tpu.memory_space<vmem>>, vector<4x384xf32>
    %c0_19 = arith.constant 0 : index
    %c129 = arith.constant 129 : index
    %31 = vector.load %arg8[%c0_19, %c129] : memref<4x640xf32, #tpu.memory_space<vmem>>, vector<4x384xf32>
    %c0_20 = arith.constant 0 : index
    %c145 = arith.constant 145 : index
    %32 = vector.load %arg8[%c0_20, %c145] : memref<4x640xf32, #tpu.memory_space<vmem>>, vector<4x384xf32>
    %c0_21 = arith.constant 0 : index
    %c146 = arith.constant 146 : index
    %33 = vector.load %arg8[%c0_21, %c146] : memref<4x640xf32, #tpu.memory_space<vmem>>, vector<4x384xf32>
    %c0_22 = arith.constant 0 : index
    %c147 = arith.constant 147 : index
    %34 = vector.load %arg8[%c0_22, %c147] : memref<4x640xf32, #tpu.memory_space<vmem>>, vector<4x384xf32>
    %35 = tpu.concatenate %26, %27, %28, %29, %30, %31, %32, %33, %34 in 0 : vector<4x384xf32>, vector<4x384xf32>, vector<4x384xf32>, vector<4x384xf32>, vector<4x384xf32>, vector<4x384xf32>, vector<4x384xf32>, vector<4x384xf32>, vector<4x384xf32> -> vector<36x384xf32>
    %36 = arith.truncf %35 : vector<36x384xf32> to vector<36x384xbf16>
    %c0_23 = arith.constant 0 : index
    %c0_24 = arith.constant 0 : index
    %37 = vector.load %arg4[%c0_23, %c0_24] : memref<8x36xbf16, #tpu.memory_space<vmem>>, vector<8x36xbf16>
    %cst_25 = arith.constant dense<0.000000e+00> : vector<8x384xf32>
    %38 = tpu.matmul %37, %36, %cst_25 {dimension_numbers = #tpu.dot_dimension_numbers<[1], [0], [0], [1], [0, 0, 1, 1], [], []>} : vector<8x36xbf16>, vector<36x384xbf16>, vector<8x384xf32> -> vector<8x384xf32>
    %c0_26 = arith.constant 0 : index
    %c0_27 = arith.constant 0 : index
    %39 = vector.load %arg5[%c0_26, %c0_27] : memref<8x1xf32, #tpu.memory_space<vmem>>, vector<8x1xf32>
    %40 = vector.broadcast %39 : vector<8x1xf32> to vector<8x384xf32>
    %41 = arith.addf %38, %40 : vector<8x384xf32>
    %cst_28 = arith.constant 0.000000e+00 : f32
    %42 = vector.broadcast %cst_28 : f32 to vector<8x384xf32>
    %43 = arith.maximumf %41, %42 : vector<8x384xf32>
    %44 = vector.shape_cast %43 : vector<8x384xf32> to vector<1x8x384xf32>
    %c0_29 = arith.constant 0 : index
    %c0_30 = arith.constant 0 : index
    %c0_31 = arith.constant 0 : index
    %45 = vector.load %arg7[%c0_29, %c0_30, %c0_31] : memref<1x8x384xf32, #tpu.memory_space<vmem>>, vector<1x8x384xf32>
    tpu.vector_store %arg7[%c0_29, %c0_30, %c0_31], %44 {strides = array<i32>} : memref<1x8x384xf32, #tpu.memory_space<vmem>>, vector<1x8x384xf32>,
    return
  }
  func.func @transform_0(%arg0: i32) -> (i32, i32, i32) {
    %c0_i32 = arith.constant 0 : i32
    %c0_i32_0 = arith.constant 0 : i32
    %c0_i32_1 = arith.constant 0 : i32
    return %arg0, %c0_i32, %c0_i32_0 : i32, i32, i32
  }
  func.func @transform_1(%arg0: i32) -> (i32, i32) {
    %c0_i32 = arith.constant 0 : i32
    %c0_i32_0 = arith.constant 0 : i32
    %c0_i32_1 = arith.constant 0 : i32
    return %c0_i32, %c0_i32_0 : i32, i32
  }
  func.func @transform_2(%arg0: i32) -> (i32, i32) {
    %c0_i32 = arith.constant 0 : i32
    %c0_i32_0 = arith.constant 0 : i32
    %c0_i32_1 = arith.constant 0 : i32
    return %c0_i32, %c0_i32_0 : i32, i32
  }
  func.func @transform_3(%arg0: i32) -> (i32, i32) {
    %c0_i32 = arith.constant 0 : i32
    %c0_i32_0 = arith.constant 0 : i32
    %c0_i32_1 = arith.constant 0 : i32
    return %c0_i32, %c0_i32_0 : i32, i32
  }
  func.func @transform_4(%arg0: i32) -> (i32, i32) {
    %c0_i32 = arith.constant 0 : i32
    %c0_i32_0 = arith.constant 0 : i32
    %c0_i32_1 = arith.constant 0 : i32
    return %c0_i32, %c0_i32_0 : i32, i32
  }
  func.func @transform_5(%arg0: i32) -> (i32, i32) {
    %c0_i32 = arith.constant 0 : i32
    %c0_i32_0 = arith.constant 0 : i32
    %c0_i32_1 = arith.constant 0 : i32
    return %c0_i32, %c0_i32_0 : i32, i32
  }
  func.func @transform_6(%arg0: i32) -> (i32, i32, i32) {
    %c0_i32 = arith.constant 0 : i32
    %c0_i32_0 = arith.constant 0 : i32
    %c0_i32_1 = arith.constant 0 : i32
    return %arg0, %c0_i32, %c0_i32_0 : i32, i32, i32
  }
}

</mosaic_0001>

<llo_original>
// kernel: up_forward.1
$region0: #{up_forward.1}
  #allocation0 [shape = 'u32[]', space=smem, size = 0x4, offset = 0x4, fixed_abs, tag = 'smem constant byte address 0x4 - core index']
  #allocation1 [shape = 'u32[72,128]{1,0:T(1,128)}', space=vmem, size = 0x9000, scoped, tag = 'internal scratch']
  #allocation2 [shape = 'f32[4,640]{1,0:T(4,128)}', space=vmem, size = 0x2800, scoped, tag = 'scratch operand']
  %s0 = inlined_call_operand.vmem [shape: f32[2,8,512], index: 0, kind: input, shape index: {}]
  %s1 = inlined_call_operand.vmem [shape: bf16[4,72], index: 1, kind: input, shape index: {}]
  %s2 = inlined_call_operand.vmem [shape: f32[4,1], index: 2, kind: input, shape index: {}]
  %s3 = inlined_call_operand.vmem [shape: bf16[8,36], index: 3, kind: input, shape index: {}]
  %s4 = inlined_call_operand.vmem [shape: f32[8,1], index: 4, kind: input, shape index: {}]
  %s5 = inlined_call_operand.vmem [shape: f32[1,384], index: 5, kind: input, shape index: {}]
  %s6 = inlined_call_operand.vmem [shape: f32[2,8,384], index: 6, kind: output, shape index: {}]
  %s7 = sld [smem:[#allocation0]]
  $region57: #{up_forward.1} parent=0
    _
  %s9 = ssub.s32 1, %s7
  %s10 = scalar_select 0, %s9, %s7
  loop: start=0, step=1, limit=4
  $region2: #{up_forward.1} parent=0 // loop_pre_header
    _
  $region3: #{up_forward.1} parent=0 // loop_header
    %s12 = sphi 0, %s16
    %p13 = scmp.ge.s32.totalorder %s12, 4
    %s22 = sphi 0, %s24
    %s25 = sphi 0, %s22
    %s26 = sphi 0, %s25
    %s42 = sphi 0, %s26
    %s46 = sphi 0, %s46
    %s48 = sphi 0, %s46
    %s49 = sphi 0, %s48
    %s63 = sphi 0, %s49
    %s67 = sphi 0, %s67
    %s69 = sphi 0, %s67
    %s70 = sphi 0, %s69
    %s84 = sphi 0, %s70
    %s88 = sphi 0, %s88
    %s90 = sphi 0, %s88
    %s91 = sphi 0, %s90
    %s105 = sphi 0, %s91
    %s109 = sphi 0, %s109
    %s111 = sphi 0, %s109
    %s112 = sphi 0, %s111
    %s126 = sphi 0, %s112
    %s130 = sphi 0, %s130
    %s132 = sphi 0, %s130
    %s133 = sphi 0, %s132
    %s147 = sphi 0, %s133
    %s153 = sphi 0, %s155
    %s156 = sphi 0, %s153
    %s157 = sphi 0, %s156
    %s173 = sphi 0, %s157
  $region4: #{up_forward.1} parent=0 // loop_header_branch
    %15 = sbr.rel (%p13) target = $region8
  $region5: #{up_forward.1} parent=0 // loop_body
    %s17 = ssub.s32 %s12, 1
    %s18 = ssub.s32 %s12, 2
    %s19 = sadd.s32 %s12, 1
    %s20 = ssub.s32 %s12, %s19
    %p21 = scmp.eq.s32.totalorder %s20, 0
    %s23 = sadd.s32 %s22, 1
    %s24 = scalar_select %p21, %s22, %s23
    %p27 = pneg %p21
    %p28 = scmp.eq.s32.totalorder %s12, 1
    %p29 = por %p27, %p28
    %p30 = scmp.ne.s32.totalorder %s22, %s25
    %p31 = scmp.eq.s32.totalorder %s12, 0
    %p32 = por %p30, %p31
    %p33 = scmp.ne.s32.totalorder %s22, %s25
    %p34 = scmp.eq.s32.totalorder %s17, 1
    %p35 = por %p33, %p34
    %p36 = scmp.ne.s32.totalorder %s25, %s26
    %p37 = scmp.eq.s32.totalorder %s17, 0
    %p38 = por %p36, %p37
    %p39 = scmp.ne.s32.totalorder %s25, %s26
    %p40 = scmp.eq.s32.totalorder %s18, 1
    %p41 = por %p39, %p40
    %p43 = scmp.ne.s32.totalorder %s26, %s42
    %p44 = scmp.eq.s32.totalorder %s18, 0
    %p45 = por %p43, %p44
    %s47 = sadd.s32 %s46, 1
    %p50 = scmp.eq.s32.totalorder %s12, 1
    %p51 = scmp.ne.s32.totalorder %s46, %s48
    %p52 = scmp.eq.s32.totalorder %s12, 0
    %p53 = por %p51, %p52
    %p54 = scmp.ne.s32.totalorder %s46, %s48
    %p55 = scmp.eq.s32.totalorder %s17, 1
    %p56 = por %p54, %p55
    %p57 = scmp.ne.s32.totalorder %s48, %s49
    %p58 = scmp.eq.s32.totalorder %s17, 0
    %p59 = por %p57, %p58
    %p60 = scmp.ne.s32.totalorder %s48, %s49
    %p61 = scmp.eq.s32.totalorder %s18, 1
    %p62 = por %p60, %p61
    %p64 = scmp.ne.s32.totalorder %s49, %s63
    %p65 = scmp.eq.s32.totalorder %s18, 0
    %p66 = por %p64, %p65
    %s68 = sadd.s32 %s67, 1
    %p71 = scmp.eq.s32.totalorder %s12, 1
    %p72 = scmp.ne.s32.totalorder %s67, %s69
    %p73 = scmp.eq.s32.totalorder %s12, 0
    %p74 = por %p72, %p73
    %p75 = scmp.ne.s32.totalorder %s67, %s69
    %p76 = scmp.eq.s32.totalorder %s17, 1
    %p77 = por %p75, %p76
    %p78 = scmp.ne.s32.totalorder %s69, %s70
    %p79 = scmp.eq.s32.totalorder %s17, 0
    %p80 = por %p78, %p79
    %p81 = scmp.ne.s32.totalorder %s69, %s70
    %p82 = scmp.eq.s32.totalorder %s18, 1
    %p83 = por %p81, %p82
    %p85 = scmp.ne.s32.totalorder %s70, %s84
    %p86 = scmp.eq.s32.totalorder %s18, 0
    %p87 = por %p85, %p86
    %s89 = sadd.s32 %s88, 1
    %p92 = scmp.eq.s32.totalorder %s12, 1
    %p93 = scmp.ne.s32.totalorder %s88, %s90
    %p94 = scmp.eq.s32.totalorder %s12, 0
    %p95 = por %p93, %p94
    %p96 = scmp.ne.s32.totalorder %s88, %s90
    %p97 = scmp.eq.s32.totalorder %s17, 1
    %p98 = por %p96, %p97
    %p99 = scmp.ne.s32.totalorder %s90, %s91
    %p100 = scmp.eq.s32.totalorder %s17, 0
    %p101 = por %p99, %p100
    %p102 = scmp.ne.s32.totalorder %s90, %s91
    %p103 = scmp.eq.s32.totalorder %s18, 1
    %p104 = por %p102, %p103
    %p106 = scmp.ne.s32.totalorder %s91, %s105
    %p107 = scmp.eq.s32.totalorder %s18, 0
    %p108 = por %p106, %p107
    %s110 = sadd.s32 %s109, 1
    %p113 = scmp.eq.s32.totalorder %s12, 1
    %p114 = scmp.ne.s32.totalorder %s109, %s111
    %p115 = scmp.eq.s32.totalorder %s12, 0
    %p116 = por %p114, %p115
    %p117 = scmp.ne.s32.totalorder %s109, %s111
    %p118 = scmp.eq.s32.totalorder %s17, 1
    %p119 = por %p117, %p118
    %p120 = scmp.ne.s32.totalorder %s111, %s112
    %p121 = scmp.eq.s32.totalorder %s17, 0
    %p122 = por %p120, %p121
    %p123 = scmp.ne.s32.totalorder %s111, %s112
    %p124 = scmp.eq.s32.totalorder %s18, 1
    %p125 = por %p123, %p124
    %p127 = scmp.ne.s32.totalorder %s112, %s126
    %p128 = scmp.eq.s32.totalorder %s18, 0
    %p129 = por %p127, %p128
    %s131 = sadd.s32 %s130, 1
    %p134 = scmp.eq.s32.totalorder %s12, 1
    %p135 = scmp.ne.s32.totalorder %s130, %s132
    %p136 = scmp.eq.s32.totalorder %s12, 0
    %p137 = por %p135, %p136
    %p138 = scmp.ne.s32.totalorder %s130, %s132
    %p139 = scmp.eq.s32.totalorder %s17, 1
    %p140 = por %p138, %p139
    %p141 = scmp.ne.s32.totalorder %s132, %s133
    %p142 = scmp.eq.s32.totalorder %s17, 0
    %p143 = por %p141, %p142
    %p144 = scmp.ne.s32.totalorder %s132, %s133
    %p145 = scmp.eq.s32.totalorder %s18, 1
    %p146 = por %p144, %p145
    %p148 = scmp.ne.s32.totalorder %s133, %s147
    %p149 = scmp.eq.s32.totalorder %s18, 0
    %p150 = por %p148, %p149
    %s151 = ssub.s32 %s12, %s19
    %p152 = scmp.eq.s32.totalorder %s151, 0
    %s154 = sadd.s32 %s153, 1
    %s155 = scalar_select %p152, %s153, %s154
    %p158 = pneg %p152
    %p159 = scmp.eq.s32.totalorder %s12, 1
    %p160 = por %p158, %p159
    %p161 = scmp.ne.s32.totalorder %s153, %s156
    %p162 = scmp.eq.s32.totalorder %s12, 0
    %p163 = por %p161, %p162
    %p164 = scmp.ne.s32.totalorder %s153, %s156
    %p165 = scmp.eq.s32.totalorder %s17, 1
    %p166 = por %p164, %p165
    %p167 = scmp.ne.s32.totalorder %s156, %s157
    %p168 = scmp.eq.s32.totalorder %s17, 0
    %p169 = por %p167, %p168
    %p170 = scmp.ne.s32.totalorder %s156, %s157
    %p171 = scmp.eq.s32.totalorder %s18, 1
    %p172 = por %p170, %p171
    %p174 = scmp.ne.s32.totalorder %s157, %s173
    %p175 = scmp.eq.s32.totalorder %s18, 0
    %p176 = por %p174, %p175
    %p177 = scmp.le.s32.totalorder 1, %s12
    %p178 = scmp.lt.s32.totalorder %s12, 3
    %p179 = pnand %p177, %p178
    %p180 = pneg %p179
    // Predicated region
    $region9: #{up_forward.1} parent=5 // pred_check
      _
    $region10: #{up_forward.1} parent=5 // pred_check_branch
      %182 = sbr.rel (%p179) target = $region12
    $region11: #{up_forward.1} parent=5 // pred_region
      %s183 = ssub.s32 %s12, 1
      // Predicated region
      $region13: #{up_forward.1} parent=11 // pred_check
        %p184 = pneg %p59
      $region14: #{up_forward.1} parent=11 // pred_check_branch
        %186 = sbr.rel (%p184) target = $region16
      $region15: #{up_forward.1} parent=11 // pred_region
        _
      $region16: #{up_forward.1} parent=11 // pred_fallthru
        _
      // Predicated region
      $region17: #{up_forward.1} parent=11 // pred_check
        %p187 = pneg %p80
      $region18: #{up_forward.1} parent=11 // pred_check_branch
        %189 = sbr.rel (%p187) target = $region20
      $region19: #{up_forward.1} parent=11 // pred_region
        _
      $region20: #{up_forward.1} parent=11 // pred_fallthru
        _
      // Predicated region
      $region21: #{up_forward.1} parent=11 // pred_check
        %p190 = pneg %p101
      $region22: #{up_forward.1} parent=11 // pred_check_branch
        %192 = sbr.rel (%p190) target = $region24
      $region23: #{up_forward.1} parent=11 // pred_region
        _
      $region24: #{up_forward.1} parent=11 // pred_fallthru
        _
      // Predicated region
      $region25: #{up_forward.1} parent=11 // pred_check
        %p193 = pneg %p122
      $region26: #{up_forward.1} parent=11 // pred_check_branch
        %195 = sbr.rel (%p193) target = $region28
      $region27: #{up_forward.1} parent=11 // pred_region
        _
      $region28: #{up_forward.1} parent=11 // pred_fallthru
        _
      // Predicated region
      $region29: #{up_forward.1} parent=11 // pred_check
        %p196 = pneg %p143
      $region30: #{up_forward.1} parent=11 // pred_check_branch
        %198 = sbr.rel (%p196) target = $region32
      $region31: #{up_forward.1} parent=11 // pred_region
        _
      $region32: #{up_forward.1} parent=11 // pred_fallthru
        _
    $region12: #{up_forward.1} parent=5 // pred_fallthru
      _
    %p199 = scmp.lt.s32.totalorder %s12, 2
    // Predicated region
    $region33: #{up_forward.1} parent=5 // pred_check
      %p200 = pneg %p199
    $region34: #{up_forward.1} parent=5 // pred_check_branch
      %202 = sbr.rel (%p200) target = $region36
    $region35: #{up_forward.1} parent=5 // pred_region
      // Predicated region
      $region37: #{up_forward.1} parent=35 // pred_check
        %p203 = pneg %p32
      $region38: #{up_forward.1} parent=35 // pred_check_branch
        %205 = sbr.rel (%p203) target = $region40
      $region39: #{up_forward.1} parent=35 // pred_region
        %p206 = scmp.lt.s32.totalorder %s12, 1
        %s207 = scalar_select %p206, %s12, 1
        %s208 = smul.addr %s207, 4
        %s209 = smul.addr %s208, 8
        %s210 = scalar_lea.vmem %s0, %s209
      $region40: #{up_forward.1} parent=35 // pred_fallthru
        _
    $region36: #{up_forward.1} parent=5 // pred_fallthru
      _
    %p211 = scmp.le.s32.totalorder 1, %s12
    %p212 = scmp.lt.s32.totalorder %s12, 3
    %p213 = pnand %p211, %p212
    %p214 = pneg %p213
    // Predicated region
    $region41: #{up_forward.1} parent=5 // pred_check
      _
    $region42: #{up_forward.1} parent=5 // pred_check_branch
      %216 = sbr.rel (%p213) target = $region44
    $region43: #{up_forward.1} parent=5 // pred_region
      %s217 = ssub.s32 %s12, 1
      %p218 = scmp.lt.s32.totalorder %s17, 1
      %s219 = scalar_select %p218, %s17, 1
      %s220 = smul.addr %s219, 4
      %s221 = smul.addr %s220, 8
      %s222 = scalar_lea.vmem %s0, %s221
      %p223 = pneg %p38
      %p224 = pneg %p35
      %p225 = pneg %p59
      %p226 = pneg %p56
      %p227 = pneg %p80
      %p228 = pneg %p77
      %p229 = pneg %p101
      %p230 = pneg %p98
      %p231 = pneg %p122
      %p232 = pneg %p119
      %p233 = pneg %p143
      %p234 = pneg %p140
      %p235 = pneg %p169
      %p236 = pneg %p166
      %p237 = scmp.lt.s32.totalorder %s17, 1
      %s238 = scalar_select %p237, %s17, 1
      %s239 = smul.addr %s238, 3
      %s240 = smul.addr %s239, 8
      %s241 = scalar_lea.vmem %s6, %s240
      %p242 = scmp.lt.s32.totalorder %s17, 1
      %s243 = scalar_select %p242, %s17, 1
      %s244 = smul.addr %s243, 4
      %s245 = smul.addr %s244, 8
      %s246 = scalar_lea.vmem %s0, %s245
      %p247 = scmp.lt.s32.totalorder %s17, 1
      %s248 = scalar_select %p247, %s17, 1
      %s249 = smul.addr %s248, 3
      %s250 = smul.addr %s249, 8
      %s251 = scalar_lea.vmem %s6, %s250
      %v253 = vld [vmem:[%s246] sm:$0xff]
      %v254 = vld [vmem:[%s246 + $0x8] sm:$0xff]
      %v255 = vld [vmem:[%s246 + $0x10] sm:$0xff]
      %v256 = vld [vmem:[%s246 + $0x18] sm:$0xff]
      %261 = vrot.lane.b32.xlu0 %v253, 127
      %v262 = vpop.permute.xlu0 %261
      %263 = vrot.lane.b32.xlu0 %v254, 127
      %v264 = vpop.permute.xlu0 %263
      %265 = vrot.lane.b32.xlu0 %v255, 127
      %v266 = vpop.permute.xlu0 %265
      %267 = vrot.lane.b32.xlu0 %v256, 127
      %v268 = vpop.permute.xlu0 %267
      %vm269 = vcmask 1039360
      %v270 = vsel %vm269, %v262, %v264
      %v271 = vsel %vm269, %v264, %v266
      %v272 = vsel %vm269, %v266, %v268
      %276 = vrot.lane.b32.xlu0 %v253, 126
      %v277 = vpop.permute.xlu0 %276
      %278 = vrot.lane.b32.xlu0 %v254, 126
      %v279 = vpop.permute.xlu0 %278
      %280 = vrot.lane.b32.xlu0 %v255, 126
      %v281 = vpop.permute.xlu0 %280
      %282 = vrot.lane.b32.xlu0 %v256, 126
      %v283 = vpop.permute.xlu0 %282
      %vm284 = vcmask 1031168
      %v285 = vsel %vm284, %v277, %v279
      %v286 = vsel %vm284, %v279, %v281
      %v287 = vsel %vm284, %v281, %v283
      %291 = vrot.lane.b32.xlu0 %v253, 110
      %v292 = vpop.permute.xlu0 %291
      %293 = vrot.lane.b32.xlu0 %v254, 110
      %v294 = vpop.permute.xlu0 %293
      %295 = vrot.lane.b32.xlu0 %v255, 110
      %v296 = vpop.permute.xlu0 %295
      %297 = vrot.lane.b32.xlu0 %v256, 110
      %v298 = vpop.permute.xlu0 %297
      %vm299 = vcmask 900096
      %v300 = vsel %vm299, %v292, %v294
      %v301 = vsel %vm299, %v294, %v296
      %v302 = vsel %vm299, %v296, %v298
      %306 = vrot.lane.b32.xlu0 %v253, 109
      %v307 = vpop.permute.xlu0 %306
      %308 = vrot.lane.b32.xlu0 %v254, 109
      %v309 = vpop.permute.xlu0 %308
      %310 = vrot.lane.b32.xlu0 %v255, 109
      %v311 = vpop.permute.xlu0 %310
      %312 = vrot.lane.b32.xlu0 %v256, 109
      %v313 = vpop.permute.xlu0 %312
      %vm314 = vcmask 891904
      %v315 = vsel %vm314, %v307, %v309
      %v316 = vsel %vm314, %v309, %v311
      %v317 = vsel %vm314, %v311, %v313
      %321 = vrot.lane.b32.xlu0 %v253, 108
      %v322 = vpop.permute.xlu0 %321
      %323 = vrot.lane.b32.xlu0 %v254, 108
      %v324 = vpop.permute.xlu0 %323
      %325 = vrot.lane.b32.xlu0 %v255, 108
      %v326 = vpop.permute.xlu0 %325
      %327 = vrot.lane.b32.xlu0 %v256, 108
      %v328 = vpop.permute.xlu0 %327
      %vm329 = vcmask 883712
      %v330 = vsel %vm329, %v322, %v324
      %v331 = vsel %vm329, %v324, %v326
      %v332 = vsel %vm329, %v326, %v328
      %336 = vrot.lane.b32.xlu0 %v253, 92
      %v337 = vpop.permute.xlu0 %336
      %338 = vrot.lane.b32.xlu0 %v254, 92
      %v339 = vpop.permute.xlu0 %338
      %340 = vrot.lane.b32.xlu0 %v255, 92
      %v341 = vpop.permute.xlu0 %340
      %342 = vrot.lane.b32.xlu0 %v256, 92
      %v343 = vpop.permute.xlu0 %342
      %vm344 = vcmask 752640
      %v345 = vsel %vm344, %v337, %v339
      %v346 = vsel %vm344, %v339, %v341
      %v347 = vsel %vm344, %v341, %v343
      %351 = vrot.lane.b32.xlu0 %v253, 91
      %v352 = vpop.permute.xlu0 %351
      %353 = vrot.lane.b32.xlu0 %v254, 91
      %v354 = vpop.permute.xlu0 %353
      %355 = vrot.lane.b32.xlu0 %v255, 91
      %v356 = vpop.permute.xlu0 %355
      %357 = vrot.lane.b32.xlu0 %v256, 91
      %v358 = vpop.permute.xlu0 %357
      %vm359 = vcmask 744448
      %v360 = vsel %vm359, %v352, %v354
      %v361 = vsel %vm359, %v354, %v356
      %v362 = vsel %vm359, %v356, %v358
      %366 = vrot.lane.b32.xlu0 %v253, 90
      %v367 = vpop.permute.xlu0 %366
      %368 = vrot.lane.b32.xlu0 %v254, 90
      %v369 = vpop.permute.xlu0 %368
      %370 = vrot.lane.b32.xlu0 %v255, 90
      %v371 = vpop.permute.xlu0 %370
      %372 = vrot.lane.b32.xlu0 %v256, 90
      %v373 = vpop.permute.xlu0 %372
      %vm374 = vcmask 736256
      %v375 = vsel %vm374, %v367, %v369
      %v376 = vsel %vm374, %v369, %v371
      %v377 = vsel %vm374, %v371, %v373
      %v381 = vpack.c.bf16 %v270, %v253
      %v382 = vpack.c.bf16 %v271, %v254
      %v383 = vpack.c.bf16 %v272, %v255
      %v384 = vpack.c.bf16 %v300, %v285
      %v385 = vpack.c.bf16 %v301, %v286
      %v386 = vpack.c.bf16 %v302, %v287
      %v387 = vpack.c.bf16 %v330, %v315
      %v388 = vpack.c.bf16 %v331, %v316
      %v389 = vpack.c.bf16 %v332, %v317
      %v390 = vpack.c.bf16 %v360, %v345
      %v391 = vpack.c.bf16 %v361, %v346
      %v392 = vpack.c.bf16 %v362, %v347
      %v393 = vpack.c.bf16 %v375, %v375
      %v394 = vpack.c.bf16 %v376, %v376
      %v395 = vpack.c.bf16 %v377, %v377
      %v396 = vld [vmem:[%s1] sm:$0x3]
      %v397 = vld [vmem:[%s2] sm:$0xf]
      %399 = vset.pattern.permute.xlu0 0
      %400 = vperm.xlu0 %399, %v397
      %v401 = vpop.permute.xlu0 %400
      %vm403 = vcmask 588800
      %v405 = vsel %vm403, %v396, 0
      %vm407 = vcmask 1043456
      %v409 = vsel %vm407, %v393, 0
      %v412 = vsel %vm407, %v394, 0
      %v415 = vsel %vm407, %v395, 0
      %417 = vmatpush.bf16.msra.mxu0 0
      %418 = vmatpush.bf16.msra.mxu0 0
      %419 = vmatpush.bf16.msra.mxu0 0
      %420 = vmatpush.bf16.msra.mxu0 %v409
      %421 = vmatpush.bf16.msra.mxu0 %v390
      %422 = vmatpush.bf16.msra.mxu0 %v387
      %423 = vmatpush.bf16.msra.mxu0 %v384
      %424 = vmatpush.bf16.msra.mxu0 %v381
      %425 = vmatmul.bf16.gmra.mxu0 %v405
      %v426 = vpop.f32.mrf.mxu0
      %v427 = vadd.f32 %v401, %v426
      %v428 = vpop.f32.mrf.mxu0
      %429 = vdwg.mxu0
      %430 = vmatpush.bf16.msra.mxu0 0
      %431 = vmatpush.bf16.msra.mxu0 0
      %432 = vmatpush.bf16.msra.mxu0 0
      %433 = vmatpush.bf16.msra.mxu0 %v412
      %434 = vmatpush.bf16.msra.mxu0 %v391
      %435 = vmatpush.bf16.msra.mxu0 %v388
      %436 = vmatpush.bf16.msra.mxu0 %v385
      %437 = vmatpush.bf16.msra.mxu0 %v382
      %438 = vmatmul.bf16.gmra.mxu0 %v405
      %v439 = vpop.f32.mrf.mxu0
      %v440 = vadd.f32 %v401, %v439
      %v441 = vpop.f32.mrf.mxu0
      %442 = vdwg.mxu0
      %443 = vmatpush.bf16.msra.mxu0 0
      %444 = vmatpush.bf16.msra.mxu0 0
      %445 = vmatpush.bf16.msra.mxu0 0
      %446 = vmatpush.bf16.msra.mxu0 %v415
      %447 = vmatpush.bf16.msra.mxu0 %v392
      %448 = vmatpush.bf16.msra.mxu0 %v389
      %449 = vmatpush.bf16.msra.mxu0 %v386
      %450 = vmatpush.bf16.msra.mxu0 %v383
      %451 = vmatmul.bf16.gmra.mxu0 %v405
      %v452 = vpop.f32.mrf.mxu0
      %v453 = vadd.f32 %v401, %v452
      %v454 = vpop.f32.mrf.mxu0
      %455 = vdwg.mxu0
      %v456 = vmax.f32 %v427, 0.0
      %v457 = vmax.f32 %v440, 0.0
      %v458 = vmax.f32 %v453, 0.0
      %v459 = vld [vmem:[%s5] sm:$0x7]
      %v461 = vperm.slane %v459, 0
      %v462 = vperm.slane %v459, 1
      %v463 = vperm.slane %v459, 2
      %v467 = vmul.f32 %v456, %v461
      %v468 = vmul.f32 %v457, %v462
      %v469 = vmul.f32 %v458, %v463
      %470 = vst [vmem:[#allocation2] sm:$0xf] 0.0
      %v473 = vrot.slane %v468, 4
      %v474 = vsel %vm407, %v467, %v473
      %476 = vst [vmem:[#allocation2 + $0x4] sm:$0xff] %v474
      %477 = vst [vmem:[#allocation2 + $0xc] sm:$0xf] %v469
      %v478 = vld [vmem:[#allocation2] sm:$0xff]
      %v479 = vld [vmem:[#allocation2 + $0x8] sm:$0xff]
      %v480 = vld [vmem:[#allocation2 + $0x4] sm:$0xff]
      %v481 = vld [vmem:[#allocation2 + $0xc] sm:$0xf]
      %v482 = vld [vmem:[#allocation2 + $0x4] sm:$0xff]
      %v483 = vld [vmem:[#allocation2 + $0xc] sm:$0xff]
      %486 = vst [vmem:[#allocation1] ss:$2 sm:$0xff] %v478
      %s487 = scalar_lea.vmem [#allocation1], 16
      %488 = vst [vmem:[%s487] ss:$2 sm:$0xff] %v479
      %v489 = vld.sshfl [vmem:[#allocation1] sm:$0xff pattern:$0x75316420]
      %v490 = vld.sshfl [vmem:[#allocation1 + $0x8] sm:$0xff pattern:$0x75316420]
      %v491 = vld.sshfl [vmem:[#allocation1 + $0x10] sm:$0xff pattern:$0x75316420]
      %v492 = vld.sshfl [vmem:[#allocation1 + $0x18] sm:$0xff pattern:$0x75316420]
      %s497 = scalar_lea.vmem [#allocation1], 1
      %498 = vst [vmem:[%s497] ss:$2 sm:$0xff] %v478
      %s499 = scalar_lea.vmem [#allocation1], 17
      %500 = vst [vmem:[%s499] ss:$2 sm:$0xff] %v479
      %v501 = vld.sshfl [vmem:[#allocation1] sm:$0xff pattern:$0x75316420]
      %v502 = vld.sshfl [vmem:[#allocation1 + $0x8] sm:$0xff pattern:$0x75316420]
      %v503 = vld.sshfl [vmem:[#allocation1 + $0x10] sm:$0xff pattern:$0x75316420]
      %v504 = vld.sshfl [vmem:[#allocation1 + $0x18] sm:$0xff pattern:$0x75316420]
      %505 = vrot.lane.b32.xlu0 %v501, 127
      %v506 = vpop.permute.xlu0 %505
      %507 = vrot.lane.b32.xlu0 %v502, 127
      %v508 = vpop.permute.xlu0 %507
      %509 = vrot.lane.b32.xlu0 %v503, 127
      %v510 = vpop.permute.xlu0 %509
      %511 = vrot.lane.b32.xlu0 %v504, 127
      %v512 = vpop.permute.xlu0 %511
      %v513 = vsel %vm269, %v506, %v508
      %v514 = vsel %vm269, %v508, %v510
      %v515 = vsel %vm269, %v510, %v512
      %520 = vst [vmem:[#allocation1] ss:$2 sm:$0xff] %v478
      %s521 = scalar_lea.vmem [#allocation1], 16
      %522 = vst [vmem:[%s521] ss:$2 sm:$0xff] %v479
      %v523 = vld.sshfl [vmem:[#allocation1] sm:$0xff pattern:$0x75316420]
      %v524 = vld.sshfl [vmem:[#allocation1 + $0x8] sm:$0xff pattern:$0x75316420]
      %v525 = vld.sshfl [vmem:[#allocation1 + $0x10] sm:$0xff pattern:$0x75316420]
      %v526 = vld.sshfl [vmem:[#allocation1 + $0x18] sm:$0xff pattern:$0x75316420]
      %527 = vrot.lane.b32.xlu0 %v523, 126
      %v528 = vpop.permute.xlu0 %527
      %529 = vrot.lane.b32.xlu0 %v524, 126
      %v530 = vpop.permute.xlu0 %529
      %531 = vrot.lane.b32.xlu0 %v525, 126
      %v532 = vpop.permute.xlu0 %531
      %533 = vrot.lane.b32.xlu0 %v526, 126
      %v534 = vpop.permute.xlu0 %533
      %v535 = vsel %vm284, %v528, %v530
      %v536 = vsel %vm284, %v530, %v532
      %v537 = vsel %vm284, %v532, %v534
      %s542 = scalar_lea.vmem [#allocation1], 1
      %543 = vst [vmem:[%s542] ss:$2 sm:$0xff] %v478
      %s544 = scalar_lea.vmem [#allocation1], 17
      %545 = vst [vmem:[%s544] ss:$2 sm:$0xff] %v479
      %v546 = vld.sshfl [vmem:[#allocation1] sm:$0xff pattern:$0x75316420]
      %v547 = vld.sshfl [vmem:[#allocation1 + $0x8] sm:$0xff pattern:$0x75316420]
      %v548 = vld.sshfl [vmem:[#allocation1 + $0x10] sm:$0xff pattern:$0x75316420]
      %v549 = vld.sshfl [vmem:[#allocation1 + $0x18] sm:$0xff pattern:$0x75316420]
      %550 = vrot.lane.b32.xlu0 %v546, 110
      %v551 = vpop.permute.xlu0 %550
      %552 = vrot.lane.b32.xlu0 %v547, 110
      %v553 = vpop.permute.xlu0 %552
      %554 = vrot.lane.b32.xlu0 %v548, 110
      %v555 = vpop.permute.xlu0 %554
      %556 = vrot.lane.b32.xlu0 %v549, 110
      %v557 = vpop.permute.xlu0 %556
      %v558 = vsel %vm299, %v551, %v553
      %v559 = vsel %vm299, %v553, %v555
      %v560 = vsel %vm299, %v555, %v557
      %567 = vst [vmem:[#allocation1] ss:$2 sm:$0xff] %v480
      %s568 = scalar_lea.vmem [#allocation1], 16
      %569 = vst [vmem:[%s568] ss:$2 sm:$0xff] %v481
      %v570 = vld.sshfl [vmem:[#allocation1] sm:$0xff pattern:$0x75316420]
      %v571 = vld.sshfl [vmem:[#allocation1 + $0x8] sm:$0xff pattern:$0x75316420]
      %v572 = vld.sshfl [vmem:[#allocation1 + $0x10] sm:$0xff pattern:$0x75316420]
      %573 = vrot.lane.b32.xlu0 %v570, 109
      %v574 = vpop.permute.xlu0 %573
      %575 = vrot.lane.b32.xlu0 %v571, 109
      %v576 = vpop.permute.xlu0 %575
      %577 = vrot.lane.b32.xlu0 %v572, 109
      %v578 = vpop.permute.xlu0 %577
      %v579 = vsel %vm314, %v574, %v576
      %v580 = vsel %vm314, %v576, %v578
      %s587 = scalar_lea.vmem [#allocation1], 1
      %588 = vst [vmem:[%s587] ss:$2 sm:$0xff] %v482
      %s589 = scalar_lea.vmem [#allocation1], 17
      %590 = vst [vmem:[%s589] ss:$2 sm:$0xff] %v483
      %v591 = vld.sshfl [vmem:[#allocation1] sm:$0xff pattern:$0x75316420]
      %v592 = vld.sshfl [vmem:[#allocation1 + $0x8] sm:$0xff pattern:$0x75316420]
      %v593 = vld.sshfl [vmem:[#allocation1 + $0x10] sm:$0xff pattern:$0x75316420]
      %v594 = vld.sshfl [vmem:[#allocation1 + $0x18] sm:$0xff pattern:$0x75316420]
      %595 = vrot.lane.b32.xlu0 %v591, 108
      %v596 = vpop.permute.xlu0 %595
      %597 = vrot.lane.b32.xlu0 %v592, 108
      %v598 = vpop.permute.xlu0 %597
      %599 = vrot.lane.b32.xlu0 %v593, 108
      %v600 = vpop.permute.xlu0 %599
      %601 = vrot.lane.b32.xlu0 %v594, 108
      %v602 = vpop.permute.xlu0 %601
      %v603 = vsel %vm329, %v596, %v598
      %v604 = vsel %vm329, %v598, %v600
      %v605 = vsel %vm329, %v600, %v602
      %610 = vst [vmem:[#allocation1] ss:$2 sm:$0xff] %v482
      %s611 = scalar_lea.vmem [#allocation1], 16
      %612 = vst [vmem:[%s611] ss:$2 sm:$0xff] %v483
      %v613 = vld.sshfl [vmem:[#allocation1] sm:$0xff pattern:$0x75316420]
      %v614 = vld.sshfl [vmem:[#allocation1 + $0x8] sm:$0xff pattern:$0x75316420]
      %v615 = vld.sshfl [vmem:[#allocation1 + $0x10] sm:$0xff pattern:$0x75316420]
      %v616 = vld.sshfl [vmem:[#allocation1 + $0x18] sm:$0xff pattern:$0x75316420]
      %617 = vrot.lane.b32.xlu0 %v613, 92
      %v618 = vpop.permute.xlu0 %617
      %619 = vrot.lane.b32.xlu0 %v614, 92
      %v620 = vpop.permute.xlu0 %619
      %621 = vrot.lane.b32.xlu0 %v615, 92
      %v622 = vpop.permute.xlu0 %621
      %623 = vrot.lane.b32.xlu0 %v616, 92
      %v624 = vpop.permute.xlu0 %623
      %v625 = vsel %vm344, %v618, %v620
      %v626 = vsel %vm344, %v620, %v622
      %v627 = vsel %vm344, %v622, %v624
      %s632 = scalar_lea.vmem [#allocation1], 1
      %633 = vst [vmem:[%s632] ss:$2 sm:$0xff] %v482
      %s634 = scalar_lea.vmem [#allocation1], 17
      %635 = vst [vmem:[%s634] ss:$2 sm:$0xff] %v483
      %v636 = vld.sshfl [vmem:[#allocation1] sm:$0xff pattern:$0x75316420]
      %v637 = vld.sshfl [vmem:[#allocation1 + $0x8] sm:$0xff pattern:$0x75316420]
      %v638 = vld.sshfl [vmem:[#allocation1 + $0x10] sm:$0xff pattern:$0x75316420]
      %v639 = vld.sshfl [vmem:[#allocation1 + $0x18] sm:$0xff pattern:$0x75316420]
      %640 = vrot.lane.b32.xlu0 %v636, 91
      %v641 = vpop.permute.xlu0 %640
      %642 = vrot.lane.b32.xlu0 %v637, 91
      %v643 = vpop.permute.xlu0 %642
      %644 = vrot.lane.b32.xlu0 %v638, 91
      %v645 = vpop.permute.xlu0 %644
      %646 = vrot.lane.b32.xlu0 %v639, 91
      %v647 = vpop.permute.xlu0 %646
      %v648 = vsel %vm359, %v641, %v643
      %v649 = vsel %vm359, %v643, %v645
      %v650 = vsel %vm359, %v645, %v647
      %655 = vst [vmem:[#allocation1] ss:$2 sm:$0xff] %v482
      %s656 = scalar_lea.vmem [#allocation1], 16
      %657 = vst [vmem:[%s656] ss:$2 sm:$0xff] %v483
      %v658 = vld.sshfl [vmem:[#allocation1] sm:$0xff pattern:$0x75316420]
      %v659 = vld.sshfl [vmem:[#allocation1 + $0x8] sm:$0xff pattern:$0x75316420]
      %v660 = vld.sshfl [vmem:[#allocation1 + $0x10] sm:$0xff pattern:$0x75316420]
      %v661 = vld.sshfl [vmem:[#allocation1 + $0x18] sm:$0xff pattern:$0x75316420]
      %662 = vrot.lane.b32.xlu0 %v658, 90
      %v663 = vpop.permute.xlu0 %662
      %664 = vrot.lane.b32.xlu0 %v659, 90
      %v665 = vpop.permute.xlu0 %664
      %666 = vrot.lane.b32.xlu0 %v660, 90
      %v667 = vpop.permute.xlu0 %666
      %668 = vrot.lane.b32.xlu0 %v661, 90
      %v669 = vpop.permute.xlu0 %668
      %v670 = vsel %vm374, %v663, %v665
      %v671 = vsel %vm374, %v665, %v667
      %v672 = vsel %vm374, %v667, %v669
      %v677 = vsel %vm407, %v489, %v513
      %v678 = vsel %vm407, %v490, %v514
      %v679 = vsel %vm407, %v491, %v515
      %v680 = vsel %vm407, %v492, %v512
      %v681 = vsel %vm407, %v535, %v558
      %v682 = vsel %vm407, %v536, %v559
      %v683 = vsel %vm407, %v537, %v560
      %v684 = vsel %vm407, %v534, %v557
      %v685 = vsel %vm407, %v574, %v596
      %v686 = vsel %vm407, %v579, %v603
      %v687 = vsel %vm407, %v580, %v604
      %v688 = vsel %vm407, %v578, %v605
      %v689 = vsel %vm407, %v618, %v641
      %v690 = vsel %vm407, %v625, %v648
      %v691 = vsel %vm407, %v626, %v649
      %v692 = vsel %vm407, %v627, %v650
      %v693 = vpack.c.bf16 %v681, %v677
      %v694 = vpack.c.bf16 %v682, %v678
      %v695 = vpack.c.bf16 %v683, %v679
      %v696 = vpack.c.bf16 %v684, %v680
      %v697 = vpack.c.bf16 %v689, %v685
      %v698 = vpack.c.bf16 %v690, %v686
      %v699 = vpack.c.bf16 %v691, %v687
      %v700 = vpack.c.bf16 %v692, %v688
      %v701 = vpack.c.bf16 %v663, %v663
      %v702 = vpack.c.bf16 %v670, %v670
      %v703 = vpack.c.bf16 %v671, %v671
      %v704 = vpack.c.bf16 %v672, %v672
      %v705 = vld [vmem:[%s3] sm:$0xf]
      %v706 = vld [vmem:[%s4] sm:$0xff]
      %708 = vset.pattern.permute.xlu0 0
      %709 = vperm.xlu0 %708, %v706
      %v710 = vpop.permute.xlu0 %709
      %724 = vrot.lane.b32.xlu0 %v693, 19
      %v725 = vpop.permute.xlu0 %724
      %726 = vrot.lane.b32.xlu0 %v694, 19
      %v727 = vpop.permute.xlu0 %726
      %728 = vrot.lane.b32.xlu0 %v695, 19
      %v729 = vpop.permute.xlu0 %728
      %730 = vrot.lane.b32.xlu0 %v696, 19
      %v731 = vpop.permute.xlu0 %730
      %732 = vrot.lane.b32.xlu0 %v697, 19
      %v733 = vpop.permute.xlu0 %732
      %734 = vrot.lane.b32.xlu0 %v698, 19
      %v735 = vpop.permute.xlu0 %734
      %736 = vrot.lane.b32.xlu0 %v699, 19
      %v737 = vpop.permute.xlu0 %736
      %738 = vrot.lane.b32.xlu0 %v700, 19
      %v739 = vpop.permute.xlu0 %738
      %740 = vrot.lane.b32.xlu0 %v701, 19
      %v741 = vpop.permute.xlu0 %740
      %742 = vrot.lane.b32.xlu0 %v702, 19
      %v743 = vpop.permute.xlu0 %742
      %744 = vrot.lane.b32.xlu0 %v703, 19
      %v745 = vpop.permute.xlu0 %744
      %746 = vrot.lane.b32.xlu0 %v704, 19
      %v747 = vpop.permute.xlu0 %746
      %vm748 = vcmask 154624
      %v749 = vsel %vm748, %v725, %v727
      %v750 = vsel %vm748, %v727, %v729
      %v751 = vsel %vm748, %v729, %v731
      %v752 = vsel %vm748, %v733, %v735
      %v753 = vsel %vm748, %v735, %v737
      %v754 = vsel %vm748, %v737, %v739
      %v755 = vsel %vm748, %v741, %v743
      %v756 = vsel %vm748, %v743, %v745
      %v757 = vsel %vm748, %v745, %v747
      %vm764 = vcmask 293888
      %v766 = vsel %vm764, %v705, 0
      %vm768 = vcmask 1041408
      %v770 = vsel %vm768, %v755, 0
      %v773 = vsel %vm768, %v756, 0
      %v776 = vsel %vm768, %v757, 0
      %778 = vmatpush.bf16.msra.mxu0 0
      %779 = vmatpush.bf16.msra.mxu0 0
      %780 = vmatpush.bf16.msra.mxu0 0
      %781 = vmatpush.bf16.msra.mxu0 0
      %782 = vmatpush.bf16.msra.mxu0 0
      %783 = vmatpush.bf16.msra.mxu0 %v770
      %784 = vmatpush.bf16.msra.mxu0 %v752
      %785 = vmatpush.bf16.msra.mxu0 %v749
      %786 = vmatmul.bf16.gmra.mxu0 %v766
      %v787 = vpop.f32.mrf.mxu0
      %v788 = vadd.f32 %v710, %v787
      %v789 = vpop.f32.mrf.mxu0
      %790 = vdwg.mxu0
      %791 = vmatpush.bf16.msra.mxu0 0
      %792 = vmatpush.bf16.msra.mxu0 0
      %793 = vmatpush.bf16.msra.mxu0 0
      %794 = vmatpush.bf16.msra.mxu0 0
      %795 = vmatpush.bf16.msra.mxu0 0
      %796 = vmatpush.bf16.msra.mxu0 %v773
      %797 = vmatpush.bf16.msra.mxu0 %v753
      %798 = vmatpush.bf16.msra.mxu0 %v750
      %799 = vmatmul.bf16.gmra.mxu0 %v766
      %v800 = vpop.f32.mrf.mxu0
      %v801 = vadd.f32 %v710, %v800
      %v802 = vpop.f32.mrf.mxu0
      %803 = vdwg.mxu0
      %804 = vmatpush.bf16.msra.mxu0 0
      %805 = vmatpush.bf16.msra.mxu0 0
      %806 = vmatpush.bf16.msra.mxu0 0
      %807 = vmatpush.bf16.msra.mxu0 0
      %808 = vmatpush.bf16.msra.mxu0 0
      %809 = vmatpush.bf16.msra.mxu0 %v776
      %810 = vmatpush.bf16.msra.mxu0 %v754
      %811 = vmatpush.bf16.msra.mxu0 %v751
      %812 = vmatmul.bf16.gmra.mxu0 %v766
      %v813 = vpop.f32.mrf.mxu0
      %v814 = vadd.f32 %v710, %v813
      %v815 = vpop.f32.mrf.mxu0
      %816 = vdwg.mxu0
      %v817 = vmax.f32 %v788, 0.0
      %v818 = vmax.f32 %v801, 0.0
      %v819 = vmax.f32 %v814, 0.0
      %820 = vst [vmem:[%s251] sm:$0xff] %v817
      %821 = vst [vmem:[%s251 + $0x8] sm:$0xff] %v818
      %822 = vst [vmem:[%s251 + $0x10] sm:$0xff] %v819
      %p823 = scmp.lt.s32.totalorder %s17, 1
      %s824 = scalar_select %p823, %s17, 1
      %s825 = smul.addr %s824, 3
      %s826 = smul.addr %s825, 8
      %s827 = scalar_lea.vmem %s6, %s826
      // Predicated region
      $region45: #{up_forward.1} parent=43 // pred_check
        %p828 = pneg %p166
      $region46: #{up_forward.1} parent=43 // pred_check_branch
        %830 = sbr.rel (%p828) target = $region48
      $region47: #{up_forward.1} parent=43 // pred_region
        _
      $region48: #{up_forward.1} parent=43 // pred_fallthru
        _
    $region44: #{up_forward.1} parent=5 // pred_fallthru
      _
    %p831 = scmp.le.s32.totalorder 2, %s12
    // Predicated region
    $region49: #{up_forward.1} parent=5 // pred_check
      %p832 = pneg %p831
    $region50: #{up_forward.1} parent=5 // pred_check_branch
      %834 = sbr.rel (%p832) target = $region52
    $region51: #{up_forward.1} parent=5 // pred_region
      %s835 = ssub.s32 %s12, 2
      // Predicated region
      $region53: #{up_forward.1} parent=51 // pred_check
        %p836 = pneg %p172
      $region54: #{up_forward.1} parent=51 // pred_check_branch
        %838 = sbr.rel (%p836) target = $region56
      $region55: #{up_forward.1} parent=51 // pred_region
        %p839 = scmp.lt.s32.totalorder %s18, 1
        %s840 = scalar_select %p839, %s18, 1
        %s841 = smul.addr %s840, 3
        %s842 = smul.addr %s841, 8
        %s843 = scalar_lea.vmem %s6, %s842
      $region56: #{up_forward.1} parent=51 // pred_fallthru
        _
    $region52: #{up_forward.1} parent=5 // pred_fallthru
      _
  $region6: #{up_forward.1} parent=0 // loop_footer
    %s16 = sadd.s32 1, %s12
  $region7: #{up_forward.1} parent=0 // loop_footer_branch
    %11 = sbr.rel target = $region3
  $region8: #{up_forward.1} parent=0 // loop_exit
    _

</llo_original>
